<compile_context>
chip_gen: v7x
topology: tpu7x:2x2x1
jax: 0.10.0
libtpu: 0.0.40
codegen_flags: <defaults>
</compile_context>

<pallas_src>
import functools

import jax
import jax.numpy as jnp
from jax.experimental import pallas as pl
from jax.experimental.pallas import tpu as pltpu

SMOOTH = 1e-6
_LANE = 128


def _vmem_capacity_bytes():
    try:
        return int(pltpu.get_tpu_info().vmem_capacity_bytes)
    except Exception:
        return 64 * 1024 * 1024  # conservative default (v7x per-TC VMEM)


def _jaccard_kernel(preds_ref, targets_ref, out_ref, inter_acc, pt_acc,
                    *, num_classes, tile_hw, hw_valid):
    """One (sample b, spatial tile t) grid step."""
    t = pl.program_id(1)
    nt = pl.num_programs(1)

    @pl.when(t == 0)
    def _init():
        inter_acc[...] = jnp.zeros_like(inter_acc)
        pt_acc[...] = jnp.zeros_like(pt_acc)

    logits = preds_ref[0].astype(jnp.float32)      # (C, TILE)
    tgt = targets_ref[0].astype(jnp.float32)       # (1, TILE)  == targets.float()

    if num_classes == 2:
        # Binary case: softmax(x)[1] == sigmoid(x1 - x0); halves the EUP work.
        d = logits[0:1, :] - logits[1:2, :]
        prob1 = pl.reciprocal(1.0 + jnp.exp(d), approx=True)
    else:
        m = jnp.max(logits, axis=0, keepdims=True)
        e = jnp.exp(logits - m)
        denom = jnp.sum(e, axis=0, keepdims=True)
        prob1 = e[1:2, :] * pl.reciprocal(denom, approx=True)

    if hw_valid % tile_hw != 0:
        # Mask lanes beyond the true H*W (targets are already zero-padded, so
        # only prob1 — softmax of padded garbage — needs masking).
        col = jax.lax.broadcasted_iota(jnp.int32, (1, tile_hw), 1)
        prob1 = jnp.where(t * tile_hw + col < hw_valid, prob1, 0.0)

    # Elementwise (VALU) partial accumulation; union = sum(p + t) - inter.
    inter_acc[...] += prob1 * tgt
    pt_acc[...] += prob1 + tgt

    @pl.when(t == nt - 1)
    def _finalize():
        inter = jnp.sum(inter_acc[...])
        union = jnp.sum(pt_acc[...]) - inter
        jac = (inter + SMOOTH) / (union + SMOOTH)
        out_ref[...] = jnp.full(out_ref.shape, jac, dtype=out_ref.dtype)


def jaccard_loss(preds, targets):
    """preds: (N, C, H, W) float logits, targets: (N, H, W) 0/1 mask."""
    N, C, H, W = preds.shape
    assert C >= 2, "JaccardLoss uses softmax channel 1; need C >= 2"
    hw = H * W

    # ---- lane-dense layout + VMEM-budgeted spatial tiling -------------------
    cap = _vmem_capacity_bytes()
    budget = cap // 4                       # working-set budget, leaves headroom
    in_bytes = preds.dtype.itemsize
    # VMEM bytes per spatial column: preds (double-buffered) + bf16 targets
    # (double-buffered) + two f32 scratch accumulators.
    bytes_per_col = 2 * C * in_bytes + 2 * 2 + 2 * 4
    tile = max(_LANE, min(pl.cdiv(hw, _LANE) * _LANE,
                          (budget // bytes_per_col) // _LANE * _LANE))
    hw_pad = pl.cdiv(hw, tile) * tile
    num_tiles = hw_pad // tile

    preds_r = preds.reshape(N, C, hw)
    tgt_r = targets.reshape(N, 1, hw).astype(jnp.bfloat16)  # exact for 0/1 masks
    if hw_pad != hw:
        pad = hw_pad - hw
        preds_r = jnp.pad(preds_r, ((0, 0), (0, 0), (0, pad)))
        tgt_r = jnp.pad(tgt_r, ((0, 0), (0, 0), (0, pad)))

    kernel = functools.partial(_jaccard_kernel, num_classes=C,
                               tile_hw=tile, hw_valid=hw)

    per_sample = pl.pallas_call(
        kernel,
        out_shape=jax.ShapeDtypeStruct((N, 1, _LANE), jnp.float32),
        grid_spec=pltpu.PrefetchScalarGridSpec(
            num_scalar_prefetch=0,
            grid=(N, num_tiles),
            in_specs=[
                pl.BlockSpec((1, C, tile), lambda b, t: (b, 0, t)),
                pl.BlockSpec((1, 1, tile), lambda b, t: (b, 0, t)),
            ],
            out_specs=pl.BlockSpec((1, 1, _LANE), lambda b, t: (b, 0, 0)),
            scratch_shapes=[
                pltpu.VMEM((1, tile), jnp.float32),   # intersection partials
                pltpu.VMEM((1, tile), jnp.float32),   # (p + t) partials
            ],
        ),
        compiler_params=pltpu.CompilerParams(
            dimension_semantics=("parallel", "arbitrary"),
            vmem_limit_bytes=int(cap * 3 // 4),
        ),
    )(preds_r, tgt_r)

    # Final 1 - mean() over the tiny per-sample vector stays in plain JAX.
    return 1.0 - jnp.mean(per_sample[:, 0, 0])


def jaccard_loss_ref(preds, targets):
    """Pure-JAX reference matching the PyTorch module."""
    p = jax.nn.softmax(preds, axis=1)[:, 1]
    t = targets.astype(jnp.float32)
    inter = jnp.sum(p * t, axis=(1, 2))
    union = jnp.sum(p, axis=(1, 2)) + jnp.sum(t, axis=(1, 2)) - inter
    jac = (inter + SMOOTH) / (union + SMOOTH)
    return 1.0 - jnp.mean(jac)


if __name__ == "__main__":
    key = jax.random.PRNGKey(0)
    k1, k2, k3, k4 = jax.random.split(key, 4)

    # Multi-class path (softmax over C=4, take channel 1).
    N, C, H, W = 2, 4, 16, 16
    preds = jax.random.normal(k1, (N, C, H, W), dtype=jnp.float32)
    targets = jax.random.bernoulli(k2, p=0.4, shape=(N, H, W)).astype(jnp.int32)
    loss = jax.block_until_ready(jaccard_loss(preds, targets))
    ref = jaccard_loss_ref(preds, targets)
    # Tolerance 1e-3: approx EUP reciprocal contributes ~1e-4 relative error.
    assert jnp.allclose(loss, ref, atol=1e-3, rtol=1e-3), (loss, ref)

    # Binary path (C=2 sigmoid shortcut) + non-multiple-of-128 spatial size
    # (exercises lane padding + in-kernel masking).
    N2, H2, W2 = 2, 10, 13
    preds2 = jax.random.normal(k3, (N2, 2, H2, W2), dtype=jnp.float32)
    targets2 = jax.random.bernoulli(k4, p=0.3, shape=(N2, H2, W2)).astype(jnp.int32)
    loss2 = jax.block_until_ready(jaccard_loss(preds2, targets2))
    ref2 = jaccard_loss_ref(preds2, targets2)
    assert jnp.allclose(loss2, ref2, atol=1e-3, rtol=1e-3), (loss2, ref2)

    print("KERNEL_OK")
</pallas_src>

<mosaic_0001>
module attributes {stable_mosaic.version = 11 : i64} {
  func.func @_jaccard_kernel(%arg0: i32, %arg1: i32, %arg2: memref<1x4x256xf32, #tpu.memory_space<vmem>>, %arg3: memref<1x1x256xbf16, #tpu.memory_space<vmem>>, %arg4: memref<1x1x128xf32, #tpu.memory_space<vmem>>, %arg5: memref<1x256xf32, #tpu.memory_space<vmem>>, %arg6: memref<1x256xf32, #tpu.memory_space<vmem>>) attributes {dimension_semantics = [#tpu.dimension_semantics<parallel>, #tpu.dimension_semantics<arbitrary>], iteration_bounds = array<i64: 2, 1>, scalar_prefetch = 0 : i64, scratch_operands = 2 : i64, tpu.core_type = #tpu.core_type<tc>, window_params = [{transform_indices = @transform_0, window_bounds = array<i64: 1, 4, 256>}, {transform_indices = @transform_1, window_bounds = array<i64: 1, 1, 256>}, {transform_indices = @transform_2, window_bounds = array<i64: 1, 1, 128>}]} {
    %c0_i32 = arith.constant 0 : i32
    %0 = arith.cmpi eq, %arg1, %c0_i32 : i32
    %1 = arith.extui %0 : i1 to i32
    %c0_i32_0 = arith.constant 0 : i32
    %2 = arith.cmpi ne, %1, %c0_i32_0 : i32
    scf.if %2 {
      %cst_17 = arith.constant 0.000000e+00 : f32
      %29 = vector.broadcast %cst_17 : f32 to vector<1x256xf32>
      %c0_18 = arith.constant 0 : index
      %c0_19 = arith.constant 0 : index
      %30 = vector.load %arg5[%c0_18, %c0_19] : memref<1x256xf32, #tpu.memory_space<vmem>>, vector<1x256xf32>
      tpu.vector_store %arg5[%c0_18, %c0_19], %29 {strides = array<i32>} : memref<1x256xf32, #tpu.memory_space<vmem>>, vector<1x256xf32>,
      %cst_20 = arith.constant 0.000000e+00 : f32
      %31 = vector.broadcast %cst_20 : f32 to vector<1x256xf32>
      %c0_21 = arith.constant 0 : index
      %c0_22 = arith.constant 0 : index
      %32 = vector.load %arg6[%c0_21, %c0_22] : memref<1x256xf32, #tpu.memory_space<vmem>>, vector<1x256xf32>
      tpu.vector_store %arg6[%c0_21, %c0_22], %31 {strides = array<i32>} : memref<1x256xf32, #tpu.memory_space<vmem>>, vector<1x256xf32>,
    } else {
    }
    %c0 = arith.constant 0 : index
    %c0_1 = arith.constant 0 : index
    %c0_2 = arith.constant 0 : index
    %3 = vector.load %arg2[%c0, %c0_1, %c0_2] : memref<1x4x256xf32, #tpu.memory_space<vmem>>, vector<1x4x256xf32>
    %4 = vector.shape_cast %3 : vector<1x4x256xf32> to vector<4x256xf32>
    %c0_3 = arith.constant 0 : index
    %c0_4 = arith.constant 0 : index
    %c0_5 = arith.constant 0 : index
    %5 = vector.load %arg3[%c0_3, %c0_4, %c0_5] : memref<1x1x256xbf16, #tpu.memory_space<vmem>>, vector<1x1x256xbf16>
    %6 = vector.shape_cast %5 : vector<1x1x256xbf16> to vector<1x256xbf16>
    %7 = arith.extf %6 : vector<1x256xbf16> to vector<1x256xf32>
    %cst = arith.constant dense<0xFF800000> : vector<256xf32>
    %8 = vector.multi_reduction <maximumf>, %4, %cst [0] : vector<4x256xf32> to vector<256xf32>
    %9 = vector.shape_cast %8 : vector<256xf32> to vector<1x256xf32>
    %10 = vector.broadcast %9 : vector<1x256xf32> to vector<4x256xf32>
    %11 = arith.subf %4, %10 : vector<4x256xf32>
    %12 = math.exp %11 : vector<4x256xf32>
    %cst_6 = arith.constant dense<0.000000e+00> : vector<256xf32>
    %13 = vector.multi_reduction <add>, %12, %cst_6 [0] : vector<4x256xf32> to vector<256xf32>
    %14 = vector.shape_cast %13 : vector<256xf32> to vector<1x256xf32>
    %15 = vector.extract_strided_slice %12 {offsets = [1, 0], sizes = [1, 256], strides = [1, 1]} : vector<4x256xf32> to vector<1x256xf32>
    %16 = tpu.reciprocal %14 {approx = true} : vector<1x256xf32> -> vector<1x256xf32>
    %17 = arith.mulf %15, %16 : vector<1x256xf32>
    %c0_7 = arith.constant 0 : index
    %c0_8 = arith.constant 0 : index
    %18 = vector.load %arg5[%c0_7, %c0_8] : memref<1x256xf32, #tpu.memory_space<vmem>>, vector<1x256xf32>
    %19 = arith.mulf %17, %7 : vector<1x256xf32>
    %20 = arith.addf %18, %19 : vector<1x256xf32>
    %c0_9 = arith.constant 0 : index
    %c0_10 = arith.constant 0 : index
    %21 = vector.load %arg5[%c0_9, %c0_10] : memref<1x256xf32, #tpu.memory_space<vmem>>, vector<1x256xf32>
    tpu.vector_store %arg5[%c0_9, %c0_10], %20 {strides = array<i32>} : memref<1x256xf32, #tpu.memory_space<vmem>>, vector<1x256xf32>,
    %c0_11 = arith.constant 0 : index
    %c0_12 = arith.constant 0 : index
    %22 = vector.load %arg6[%c0_11, %c0_12] : memref<1x256xf32, #tpu.memory_space<vmem>>, vector<1x256xf32>
    %23 = arith.addf %17, %7 : vector<1x256xf32>
    %24 = arith.addf %22, %23 : vector<1x256xf32>
    %c0_13 = arith.constant 0 : index
    %c0_14 = arith.constant 0 : index
    %25 = vector.load %arg6[%c0_13, %c0_14] : memref<1x256xf32, #tpu.memory_space<vmem>>, vector<1x256xf32>
    tpu.vector_store %arg6[%c0_13, %c0_14], %24 {strides = array<i32>} : memref<1x256xf32, #tpu.memory_space<vmem>>, vector<1x256xf32>,
    %c0_i32_15 = arith.constant 0 : i32
    %26 = arith.cmpi eq, %arg1, %c0_i32_15 : i32
    %27 = arith.extui %26 : i1 to i32
    %c0_i32_16 = arith.constant 0 : i32
    %28 = arith.cmpi ne, %27, %c0_i32_16 : i32
    scf.if %28 {
      %c0_17 = arith.constant 0 : index
      %c0_18 = arith.constant 0 : index
      %29 = vector.load %arg5[%c0_17, %c0_18] : memref<1x256xf32, #tpu.memory_space<vmem>>, vector<1x256xf32>
      %30 = vector.shape_cast %29 : vector<1x256xf32> to vector<1x1x256xf32>
      %cst_19 = arith.constant dense<0.000000e+00> : vector<1xf32>
      %31 = vector.multi_reduction <add>, %30, %cst_19 [1, 2] : vector<1x1x256xf32> to vector<1xf32>
      %32 = vector.shape_cast %31 : vector<1xf32> to vector<1x1x1xf32>
      %33 = vector.extract %32[0, 0, 0] : f32 from vector<1x1x1xf32>
      %c0_20 = arith.constant 0 : index
      %c0_21 = arith.constant 0 : index
      %34 = vector.load %arg6[%c0_20, %c0_21] : memref<1x256xf32, #tpu.memory_space<vmem>>, vector<1x256xf32>
      %35 = vector.shape_cast %34 : vector<1x256xf32> to vector<1x1x256xf32>
      %cst_22 = arith.constant dense<0.000000e+00> : vector<1xf32>
      %36 = vector.multi_reduction <add>, %35, %cst_22 [1, 2] : vector<1x1x256xf32> to vector<1xf32>
      %37 = vector.shape_cast %36 : vector<1xf32> to vector<1x1x1xf32>
      %38 = vector.extract %37[0, 0, 0] : f32 from vector<1x1x1xf32>
      %39 = arith.subf %38, %33 : f32
      %cst_23 = arith.constant 9.99999997E-7 : f32
      %40 = arith.addf %33, %cst_23 : f32
      %cst_24 = arith.constant 9.99999997E-7 : f32
      %41 = arith.addf %39, %cst_24 : f32
      %42 = arith.divf %40, %41 : f32
      %43 = vector.broadcast %42 : f32 to vector<1x1x128xf32>
      %c0_25 = arith.constant 0 : index
      %c0_26 = arith.constant 0 : index
      %c0_27 = arith.constant 0 : index
      %44 = vector.load %arg4[%c0_25, %c0_26, %c0_27] : memref<1x1x128xf32, #tpu.memory_space<vmem>>, vector<1x1x128xf32>
      tpu.vector_store %arg4[%c0_25, %c0_26, %c0_27], %43 {strides = array<i32>} : memref<1x1x128xf32, #tpu.memory_space<vmem>>, vector<1x1x128xf32>,
    } else {
    }
    return
  }
  func.func @transform_0(%arg0: i32, %arg1: i32) -> (i32, i32, i32) {
    %c0_i32 = arith.constant 0 : i32
    %c0_i32_0 = arith.constant 0 : i32
    return %arg0, %c0_i32, %arg1 : i32, i32, i32
  }
  func.func @transform_1(%arg0: i32, %arg1: i32) -> (i32, i32, i32) {
    %c0_i32 = arith.constant 0 : i32
    %c0_i32_0 = arith.constant 0 : i32
    return %arg0, %c0_i32, %arg1 : i32, i32, i32
  }
  func.func @transform_2(%arg0: i32, %arg1: i32) -> (i32, i32, i32) {
    %c0_i32 = arith.constant 0 : i32
    %c0_i32_0 = arith.constant 0 : i32
    %c0_i32_1 = arith.constant 0 : i32
    return %arg0, %c0_i32, %c0_i32_0 : i32, i32, i32
  }
}

</mosaic_0001>

<llo_original>
// kernel: tpu_custom_call.1
$region0: #{tpu_custom_call.1}
  #allocation0 [shape = 'u32[]', space=smem, size = 0x4, offset = 0x4, fixed_abs, tag = 'smem constant byte address 0x4 - core index']
  #allocation1 [shape = 'u32[144,128]{1,0:T(1,128)}', space=vmem, size = 0x12000, scoped, tag = 'internal scratch']
  #allocation2 [shape = 'f32[1,256]{1,0:T(1,128)}', space=vmem, size = 0x400, scoped, tag = 'scratch operand']
  #allocation3 [shape = 'f32[1,256]{1,0:T(1,128)}', space=vmem, size = 0x400, scoped, tag = 'scratch operand']
  %s0 = inlined_call_operand.hbm [shape: f32[2,4,256], index: 0, kind: input, shape index: {}]
  %s1 = inlined_call_operand.vmem [shape: bf16[2,1,256], index: 1, kind: input, shape index: {}]
  %s2 = inlined_call_operand.hbm [shape: f32[2,1,128], index: 2, kind: output, shape index: {}]
  %s3 = sld [smem:[#allocation0]]
  $region53: #{tpu_custom_call.1} parent=0
    _
  %s5 = ssub.s32 1, %s3
  %s6 = scalar_select 0, %s5, %s3
  $region1: #{tpu_custom_call.1} parent=0
    #allocation4 [shape = 'u8[8192]{0}', space=vmem, size = 0x2000, scoped, tag = 'input window, operand 0']
    #allocation5 [shape = 's32[2]{0}', space=sflag, size = 0x8, scoped, tag = 'scoped memory for tpu_custom_call.1']
    #allocation6 [shape = 's32[2]{0}', space=sflag, size = 0x8, scoped, tag = 'scoped memory for tpu_custom_call.1']
    #allocation7 [shape = 'u8[1024]{0}', space=vmem, size = 0x400, scoped, tag = 'output window, operand 0']
    %7 = vsyncpa [#allocation5], 0
    %s8 = scalar_lea.sflag [#allocation5], 1
    %9 = vsyncpa %s8, 0
    %10 = vsyncpa [#allocation6], 0
    %s11 = scalar_lea.sflag [#allocation6], 1
    %12 = vsyncpa %s11, 0
    loop: start=0, step=1, limit=4
    $region2: #{tpu_custom_call.1} parent=1 // loop_pre_header
      _
    $region3: #{tpu_custom_call.1} parent=1 // loop_header
      %s14 = sphi 0, %s18
      %p15 = scmp.ge.s32.totalorder %s14, 4
      %s21 = sphi 0, %s33
      %s22 = sphi 0, %s29
      %s23 = sphi 0, %s21
      %s24 = sphi 0, %s22
      %s25 = sphi 0, %s23
      %s26 = sphi 0, %s24
      %s38 = sphi 0, %s40
      %s41 = sphi 0, %s38
      %s42 = sphi 0, %s41
      %s58 = sphi 0, %s42
      %s66 = sphi 0, %s68
      %s69 = sphi 0, %s66
      %s70 = sphi 0, %s69
      %s86 = sphi 0, %s70
      %s92 = sphi 0, %s94
      %s95 = sphi 0, %s92
      %s96 = sphi 0, %s95
      %s112 = sphi 0, %s96
    $region4: #{tpu_custom_call.1} parent=1 // loop_header_branch
      %17 = sbr.rel (%p15) target = $region8
    $region5: #{tpu_custom_call.1} parent=1 // loop_body
      %s19 = ssub.s32 %s14, 1
      %s20 = ssub.s32 %s14, 2
      %s27 = sadd.s32 1, %s22
      %p28 = scmp.ge.s32.totalorder %s27, 1
      %s29 = scalar_select %p28, 0, %s27
      %s30 = sadd.s32 1, %s21
      %s31 = scalar_select %p28, %s30, %s21
      %p32 = scmp.ge.s32.totalorder %s31, 2
      %s33 = scalar_select %p32, 0, %s31
      %s34 = ssub.s32 %s21, %s33
      %s35 = ssub.s32 %s22, %s29
      %s36 = sor.u32 %s34, %s35
      %p37 = scmp.eq.s32.totalorder %s36, 0
      %s39 = sadd.s32 %s38, 1
      %s40 = scalar_select %p37, %s38, %s39
      %p43 = pneg %p37
      %p44 = scmp.eq.s32.totalorder %s14, 1
      %p45 = por %p43, %p44
      %p46 = scmp.ne.s32.totalorder %s38, %s41
      %p47 = scmp.eq.s32.totalorder %s14, 0
      %p48 = por %p46, %p47
      %p49 = scmp.ne.s32.totalorder %s38, %s41
      %p50 = scmp.eq.s32.totalorder %s19, 1
      %p51 = por %p49, %p50
      %p52 = scmp.ne.s32.totalorder %s41, %s42
      %p53 = scmp.eq.s32.totalorder %s19, 0
      %p54 = por %p52, %p53
      %p55 = scmp.ne.s32.totalorder %s41, %s42
      %p56 = scmp.eq.s32.totalorder %s20, 1
      %p57 = por %p55, %p56
      %p59 = scmp.ne.s32.totalorder %s42, %s58
      %p60 = scmp.eq.s32.totalorder %s20, 0
      %p61 = por %p59, %p60
      %s62 = ssub.s32 %s21, %s33
      %s63 = ssub.s32 %s22, %s29
      %s64 = sor.u32 %s62, %s63
      %p65 = scmp.eq.s32.totalorder %s64, 0
      %s67 = sadd.s32 %s66, 1
      %s68 = scalar_select %p65, %s66, %s67
      %p71 = pneg %p65
      %p72 = scmp.eq.s32.totalorder %s14, 1
      %p73 = por %p71, %p72
      %p74 = scmp.ne.s32.totalorder %s66, %s69
      %p75 = scmp.eq.s32.totalorder %s14, 0
      %p76 = por %p74, %p75
      %p77 = scmp.ne.s32.totalorder %s66, %s69
      %p78 = scmp.eq.s32.totalorder %s19, 1
      %p79 = por %p77, %p78
      %p80 = scmp.ne.s32.totalorder %s69, %s70
      %p81 = scmp.eq.s32.totalorder %s19, 0
      %p82 = por %p80, %p81
      %p83 = scmp.ne.s32.totalorder %s69, %s70
      %p84 = scmp.eq.s32.totalorder %s20, 1
      %p85 = por %p83, %p84
      %p87 = scmp.ne.s32.totalorder %s70, %s86
      %p88 = scmp.eq.s32.totalorder %s20, 0
      %p89 = por %p87, %p88
      %s90 = ssub.s32 %s21, %s33
      %p91 = scmp.eq.s32.totalorder %s90, 0
      %s93 = sadd.s32 %s92, 1
      %s94 = scalar_select %p91, %s92, %s93
      %p97 = pneg %p91
      %p98 = scmp.eq.s32.totalorder %s14, 1
      %p99 = por %p97, %p98
      %p100 = scmp.ne.s32.totalorder %s92, %s95
      %p101 = scmp.eq.s32.totalorder %s14, 0
      %p102 = por %p100, %p101
      %p103 = scmp.ne.s32.totalorder %s92, %s95
      %p104 = scmp.eq.s32.totalorder %s19, 1
      %p105 = por %p103, %p104
      %p106 = scmp.ne.s32.totalorder %s95, %s96
      %p107 = scmp.eq.s32.totalorder %s19, 0
      %p108 = por %p106, %p107
      %p109 = scmp.ne.s32.totalorder %s95, %s96
      %p110 = scmp.eq.s32.totalorder %s20, 1
      %p111 = por %p109, %p110
      %p113 = scmp.ne.s32.totalorder %s96, %s112
      %p114 = scmp.eq.s32.totalorder %s20, 0
      %p115 = por %p113, %p114
      %p116 = scmp.le.s32.totalorder 1, %s14
      %p117 = scmp.lt.s32.totalorder %s14, 3
      %p118 = pnand %p116, %p117
      %p119 = pneg %p118
      // Predicated region
      $region9: #{tpu_custom_call.1} parent=5 // pred_check
        _
      $region10: #{tpu_custom_call.1} parent=5 // pred_check_branch
        %121 = sbr.rel (%p118) target = $region12
      $region11: #{tpu_custom_call.1} parent=5 // pred_region
        %s122 = ssub.s32 %s14, 1
      $region12: #{tpu_custom_call.1} parent=5 // pred_fallthru
        _
      %p123 = scmp.lt.s32.totalorder %s14, 2
      // Predicated region
      $region13: #{tpu_custom_call.1} parent=5 // pred_check
        %p124 = pneg %p123
      $region14: #{tpu_custom_call.1} parent=5 // pred_check_branch
        %126 = sbr.rel (%p124) target = $region16
      $region15: #{tpu_custom_call.1} parent=5 // pred_region
        // Predicated region
        $region17: #{tpu_custom_call.1} parent=15 // pred_check
          %p127 = pneg %p48
        $region18: #{tpu_custom_call.1} parent=15 // pred_check_branch
          %129 = sbr.rel (%p127) target = $region20
        $region19: #{tpu_custom_call.1} parent=15 // pred_region
          %s130 = sand.u32 %s38, 1
          %s131 = scalar_lea.sflag [#allocation5], %s130
          %s132 = sand.u32 %s38, 1
          %s133 = smul.addr %s132, 8
          %s134 = scalar_lea.vmem [#allocation4], %s133
          %s135 = smul.u32 2, %s22
          %s137 = ssub.s32 128, 128
          %138 = vsyncadd %s131, %s137
          %s139 = smul.addr %s21, 2
          %s140 = sadd.s32 %s135, %s139
          %s141 = smul.addr %s140, 64
          %s142 = scalar_lea.hbm %s0, %s141
          %s144 = sshll.u32 %s134, 4
          %s145 = int_to_ptr.vmem [resolvable:$true] %s144
          %147 = dma.hbm_to_vmem [thread:$0]  %s142, 128, %s145, %s131
        $region20: #{tpu_custom_call.1} parent=15 // pred_fallthru
          _
        // Predicated region
        $region21: #{tpu_custom_call.1} parent=15 // pred_check
          %p148 = pneg %p76
        $region22: #{tpu_custom_call.1} parent=15 // pred_check_branch
          %150 = sbr.rel (%p148) target = $region24
        $region23: #{tpu_custom_call.1} parent=15 // pred_region
          %s151 = smul.u32 2, %s22
          %p152 = scmp.lt.s32.totalorder %s21, 1
          %s153 = scalar_select %p152, %s21, 1
          %p154 = scmp.lt.s32.totalorder %s151, 1
          %s155 = scalar_select %p154, %s151, 1
          %s156 = smul.addr %s153, 2
          %s157 = sadd.s32 %s155, %s156
          %s158 = scalar_lea.vmem %s1, %s157
          %s159 = smul.u32 2, %s22
        $region24: #{tpu_custom_call.1} parent=15 // pred_fallthru
          _
      $region16: #{tpu_custom_call.1} parent=5 // pred_fallthru
        _
      %p160 = scmp.le.s32.totalorder 1, %s14
      %p161 = scmp.lt.s32.totalorder %s14, 3
      %p162 = pnand %p160, %p161
      %p163 = pneg %p162
      // Predicated region
      $region25: #{tpu_custom_call.1} parent=5 // pred_check
        _
      $region26: #{tpu_custom_call.1} parent=5 // pred_check_branch
        %165 = sbr.rel (%p162) target = $region28
      $region27: #{tpu_custom_call.1} parent=5 // pred_region
        %s166 = ssub.s32 %s14, 1
        %s167 = sand.u32 %s41, 1
        %s168 = scalar_lea.sflag [#allocation5], %s167
        %s169 = sand.u32 %s41, 1
        %s170 = smul.addr %s169, 8
        %s171 = scalar_lea.vmem [#allocation4], %s170
        // Predicated region
        $region29: #{tpu_custom_call.1} parent=27 // pred_check
          %p172 = pneg %p54
        $region30: #{tpu_custom_call.1} parent=27 // pred_check_branch
          %174 = sbr.rel (%p172) target = $region32
        $region31: #{tpu_custom_call.1} parent=27 // pred_region
          %175 = dma.done %s168, 128
        $region32: #{tpu_custom_call.1} parent=27 // pred_fallthru
          _
        %s176 = sand.u32 %s41, 1
        %s177 = scalar_lea.sflag [#allocation5], %s176
        %s178 = sand.u32 %s41, 1
        %s179 = smul.addr %s178, 8
        %s180 = scalar_lea.vmem [#allocation4], %s179
        %p181 = pneg %p54
        %p182 = pneg %p51
        %s183 = smul.u32 2, %s24
        %p184 = scmp.lt.s32.totalorder %s23, 1
        %s185 = scalar_select %p184, %s23, 1
        %p186 = scmp.lt.s32.totalorder %s183, 1
        %s187 = scalar_select %p186, %s183, 1
        %s188 = smul.addr %s185, 2
        %s189 = sadd.s32 %s187, %s188
        %s190 = scalar_lea.vmem %s1, %s189
        %p191 = pneg %p82
        %p192 = pneg %p79
        %p193 = pneg %p108
        %p194 = pneg %p105
        %s195 = sand.u32 %s95, 1
        %s196 = scalar_lea.sflag [#allocation6], %s195
        %s197 = sand.u32 %s95, 1
        %s198 = scalar_lea.vmem [#allocation7], %s197
        %s199 = smul.u32 2, %s24
        %s200 = smul.u32 2, %s24
        %p201 = scmp.lt.s32.totalorder %s23, 1
        %s202 = scalar_select %p201, %s23, 1
        %p203 = scmp.lt.s32.totalorder %s200, 1
        %s204 = scalar_select %p203, %s200, 1
        %s205 = smul.addr %s202, 2
        %s206 = sadd.s32 %s204, %s205
        %s207 = scalar_lea.vmem %s1, %s206
        %s208 = smul.u32 2, %s24
        %p209 = scmp.eq.s32.totalorder %s24, 0
        // Predicated region
        $region33: #{tpu_custom_call.1} parent=27 // pred_check
          %p210 = pneg %p209
        $region34: #{tpu_custom_call.1} parent=27 // pred_check_branch
          %212 = sbr.rel (%p210) target = $region36
        $region35: #{tpu_custom_call.1} parent=27 // pred_region
          %v213 = vlaneseq
          %vm214 = vcmp.ge.s32.totalorder %v213, 0
          %vm215 = vcmp.lt.s32.totalorder %v213, 256
          %vm216 = vmand %vm214, %vm215
          %217 = vst.msk [vmem:[#allocation2] sm:$0x3] %vm216, 0.0
          %218 = vst.msk [vmem:[#allocation3] sm:$0x3] %vm216, 0.0
        $region36: #{tpu_custom_call.1} parent=27 // pred_fallthru
          _
        %v219 = vld [vmem:[%s171] sm:$0xff]
        %v220 = vld [vmem:[%s207] sm:$0x3]
        %v221 = vunpack.c.l.bf16 %v220
        %v223 = vcombine.high %v219, %v219
        %vm225 = vcmask 1043456
        %v226 = vsel %vm225, %v219, -inf
        %v227 = vrot.slane %v226, 4
        %v228 = vmax.f32 %v226, %v227
        %v229 = vrot.slane %v228, 2
        %v230 = vmax.f32 %v228, %v229
        %v231 = vrot.slane %v230, 1
        %v232 = vmax.f32 %v230, %v231
        %v233 = vsel %vm225, %v223, -inf
        %v234 = vrot.slane %v233, 4
        %v235 = vmax.f32 %v233, %v234
        %v236 = vrot.slane %v235, 2
        %v237 = vmax.f32 %v235, %v236
        %v238 = vrot.slane %v237, 1
        %v239 = vmax.f32 %v237, %v238
        %v242 = vcombine.low %v232, %v239
        %v244 = vsub.f32 %v219, %v242
        %v245 = vmul.f32 %v244, 1.442695
        %v246 = vpow.pop %v245
        %v248 = vcombine.high %v246, %v246
        %v250 = vsel %vm225, %v246, 0.0
        %v251 = vrot.slane %v250, 4
        %v252 = vadd.f32 %v250, %v251
        %v253 = vrot.slane %v252, 2
        %v254 = vadd.f32 %v252, %v253
        %v255 = vrot.slane %v254, 1
        %v256 = vadd.f32 %v254, %v255
        %v257 = vsel %vm225, %v248, 0.0
        %v258 = vrot.slane %v257, 4
        %v259 = vadd.f32 %v257, %v258
        %v260 = vrot.slane %v259, 2
        %v261 = vadd.f32 %v259, %v260
        %v262 = vrot.slane %v261, 1
        %v263 = vadd.f32 %v261, %v262
        %v264 = vrcp.pop %v256
        %v265 = vrcp.pop %v263
        %v268 = vcombine.low %v264, %v265
        %v269 = vrot.slane %v268, 7
        %v271 = vmul.f32 %v246, %v269
        %v272 = vld [vmem:[#allocation2] sm:$0x3]
        %v275 = vunpack.c.l.s4 572653568
        %v276 = vunpack.c.0.s8 %v275
        %v277 = vlaneseq
        %v278 = vshrl.u32 %v277, 7
        %v279 = vsub.s32 %v276, %v278
        %v280 = vrot.slane %v221, %v279
        %v282 = vmul.f32 %v271, %v280
        %v285 = vunpack.c.l.s4 1966171168
        %v286 = vunpack.c.0.s8 %v285
        %v287 = vlaneseq
        %v288 = vshrl.u32 %v287, 7
        %v289 = vsub.s32 %v286, %v288
        %v290 = vrot.slane %v282, %v289
        %v291 = vcombine.high %v290, %v290
        %v293 = vunpack.c.l.s4 1966171168
        %v294 = vunpack.c.0.s8 %v293
        %v295 = vlaneseq
        %v296 = vshrl.u32 %v295, 7
        %v297 = vsub.s32 %v294, %v296
        %v298 = vrot.slane %v291, %v297
        %v300 = vadd.f32 %v272, %v298
        %v301 = vlaneseq
        %vm302 = vcmp.ge.s32.totalorder %v301, 0
        %vm303 = vcmp.lt.s32.totalorder %v301, 256
        %vm304 = vmand %vm302, %vm303
        %305 = vst.msk [vmem:[#allocation2] sm:$0x3] %vm304, %v300
        %v306 = vld [vmem:[#allocation3] sm:$0x3]
        %v307 = vadd.f32 %v271, %v280
        %v310 = vunpack.c.l.s4 1966171168
        %v311 = vunpack.c.0.s8 %v310
        %v312 = vlaneseq
        %v313 = vshrl.u32 %v312, 7
        %v314 = vsub.s32 %v311, %v313
        %v315 = vrot.slane %v307, %v314
        %v316 = vcombine.high %v315, %v315
        %v318 = vunpack.c.l.s4 1966171168
        %v319 = vunpack.c.0.s8 %v318
        %v320 = vlaneseq
        %v321 = vshrl.u32 %v320, 7
        %v322 = vsub.s32 %v319, %v321
        %v323 = vrot.slane %v316, %v322
        %v325 = vadd.f32 %v306, %v323
        %326 = vst.msk [vmem:[#allocation3] sm:$0x3] %vm304, %v325
        // Predicated region
        $region37: #{tpu_custom_call.1} parent=27 // pred_check
          %p327 = pneg %p209
        $region38: #{tpu_custom_call.1} parent=27 // pred_check_branch
          %329 = sbr.rel (%p327) target = $region40
        $region39: #{tpu_custom_call.1} parent=27 // pred_region
          %v330 = vld [vmem:[#allocation2] sm:$0x3]
          %v332 = vlaneseq
          %v333 = vshrl.u32 %v332, 7
          %v334 = vsub.s32 0, %v333
          %v335 = vrot.slane %v330, %v334
          %v336 = vlaneseq
          %v337 = vshrl.u32 %v336, 7
          %v338 = vsub.s32 1, %v337
          %v339 = vrot.slane %v330, %v338
          %vm342 = vcmask 1040384
          %v343 = vsel %vm342, %v335, 0.0
          %v344 = vsel %vm342, %v339, 0.0
          %v345 = vadd.f32 %v343, %v344
          %346 = vadd.xlane.f32.xlu0 %v345
          %v347 = vpop.xlane.xlu0 %346
          %v348 = vrot.slane %v347, 4
          %v349 = vadd.f32 %v347, %v348
          %v350 = vrot.slane %v349, 2
          %v351 = vadd.f32 %v349, %v350
          %v352 = vrot.slane %v351, 1
          %v353 = vadd.f32 %v351, %v352
          %s354 = vtos %v353
          %v355 = vld [vmem:[#allocation3] sm:$0x3]
          %v357 = vlaneseq
          %v358 = vshrl.u32 %v357, 7
          %v359 = vsub.s32 0, %v358
          %v360 = vrot.slane %v355, %v359
          %v361 = vlaneseq
          %v362 = vshrl.u32 %v361, 7
          %v363 = vsub.s32 1, %v362
          %v364 = vrot.slane %v355, %v363
          %v367 = vsel %vm342, %v360, 0.0
          %v368 = vsel %vm342, %v364, 0.0
          %v369 = vadd.f32 %v367, %v368
          %370 = vadd.xlane.f32.xlu0 %v369
          %v371 = vpop.xlane.xlu0 %370
          %v372 = vrot.slane %v371, 4
          %v373 = vadd.f32 %v371, %v372
          %v374 = vrot.slane %v373, 2
          %v375 = vadd.f32 %v373, %v374
          %v376 = vrot.slane %v375, 1
          %v377 = vadd.f32 %v375, %v376
          %s378 = vtos %v377
          %s379 = ssub.f32 %s378, %s354
          %s380 = sadd.f32 %s354, 1e-06
          %s381 = sadd.f32 %s379, 1e-06
          %v382 = vstv %s381
          %v383 = vrcp.pop %v382
          %s384 = vtos %v383
          %s385 = smul.f32 %s380, %s384
          %v386 = vstv %s385
          %387 = vst [vmem:[%s198] sm:$0x1] %v386
        $region40: #{tpu_custom_call.1} parent=27 // pred_fallthru
          _
        %s388 = sand.u32 %s95, 1
        %s389 = scalar_lea.sflag [#allocation6], %s388
        %s390 = sand.u32 %s95, 1
        %s391 = scalar_lea.vmem [#allocation7], %s390
        // Predicated region
        $region41: #{tpu_custom_call.1} parent=27 // pred_check
          %p392 = pneg %p105
        $region42: #{tpu_custom_call.1} parent=27 // pred_check_branch
          %394 = sbr.rel (%p392) target = $region44
        $region43: #{tpu_custom_call.1} parent=27 // pred_region
          %s396 = ssub.s32 16, 16
          %397 = vsyncadd %s389, %s396
          %s398 = smul.addr %s23, 16
          %s399 = scalar_lea.hbm %s2, %s398
          %s401 = sshll.u32 %s391, 4
          %s402 = int_to_ptr.vmem [resolvable:$true] %s401
          %404 = dma.vmem_to_hbm [thread:$0]  %s402, 16, %s399, %s389
        $region44: #{tpu_custom_call.1} parent=27 // pred_fallthru
          _
      $region28: #{tpu_custom_call.1} parent=5 // pred_fallthru
        _
      %p405 = scmp.le.s32.totalorder 2, %s14
      // Predicated region
      $region45: #{tpu_custom_call.1} parent=5 // pred_check
        %p406 = pneg %p405
      $region46: #{tpu_custom_call.1} parent=5 // pred_check_branch
        %408 = sbr.rel (%p406) target = $region48
      $region47: #{tpu_custom_call.1} parent=5 // pred_region
        %s409 = ssub.s32 %s14, 2
        // Predicated region
        $region49: #{tpu_custom_call.1} parent=47 // pred_check
          %p410 = pneg %p111
        $region50: #{tpu_custom_call.1} parent=47 // pred_check_branch
          %412 = sbr.rel (%p410) target = $region52
        $region51: #{tpu_custom_call.1} parent=47 // pred_region
          %s413 = sand.u32 %s96, 1
          %s414 = scalar_lea.sflag [#allocation6], %s413
          %s415 = sand.u32 %s96, 1
          %s416 = scalar_lea.vmem [#allocation7], %s415
          %417 = dma.done %s414, 16
        $region52: #{tpu_custom_call.1} parent=47 // pred_fallthru
          _
      $region48: #{tpu_custom_call.1} parent=5 // pred_fallthru
        _
    $region6: #{tpu_custom_call.1} parent=1 // loop_footer
      %s18 = sadd.s32 1, %s14
    $region7: #{tpu_custom_call.1} parent=1 // loop_footer_branch
      %13 = sbr.rel target = $region3
    $region8: #{tpu_custom_call.1} parent=1 // loop_exit
      _
    %418 = vsyncpa [#allocation5], 1
    %s419 = scalar_lea.sflag [#allocation5], 1
    %420 = vsyncpa %s419, 1
    %421 = vsyncpa [#allocation6], 1
    %s422 = scalar_lea.sflag [#allocation6], 1
    %423 = vsyncpa %s422, 1

</llo_original>
